<compile_context>
chip_gen: v7x
topology: tpu7x:2x2x1
jax: 0.10.0
libtpu: 0.0.40
codegen_flags: <defaults>
</compile_context>

<pallas_src>
import functools

import jax
import jax.numpy as jnp
import numpy as np
from jax.experimental import pallas as pl
from jax.experimental.pallas import tpu as pltpu


# ----------------------------- kernels --------------------------------------

def _stage1_kernel(x_ref, cd_ref, sd_ref, a_ref, b_ref):
    # x_ref: (TM, Dp) bf16 rows of the (B*Sp, Dp) matrix; cd/sd: (Dp, Dp) bf16.
    x = x_ref[...]
    a = jnp.dot(x, cd_ref[...], preferred_element_type=jnp.float32)  # Re(FFT_-1)
    b = jnp.dot(x, sd_ref[...], preferred_element_type=jnp.float32)  # -Im(FFT_-1)
    a_ref[...] = a.astype(a_ref.dtype)
    b_ref[...] = b.astype(b_ref.dtype)


def _stage2_kernel(cs_ref, ss_ref, a_ref, b_ref, o_ref):
    # Grid = (batch, out-row tile i, seq-contraction tile k); k is last.
    # o_ref (f32) is resident across k and doubles as the accumulator, so no
    # extra VMEM scratch is needed.
    @pl.when(pl.program_id(2) == 0)
    def _init():
        o_ref[...] = jnp.zeros_like(o_ref)

    o_ref[...] += (
        jnp.dot(cs_ref[...], a_ref[...], preferred_element_type=jnp.float32)
        - jnp.dot(ss_ref[...], b_ref[...], preferred_element_type=jnp.float32))


# ----------------------------- helpers --------------------------------------

def _round_up(x, m):
    return ((x + m - 1) // m) * m


@functools.lru_cache(maxsize=None)
def _dft_cos_sin_padded(n, n_pad):
    """cos/sin DFT matrices of size n, zero-padded to (n_pad, n_pad), bf16."""
    k = np.arange(n, dtype=np.int64)
    prod = (k[:, None] * k[None, :]) % n            # exact integer mod-n
    ang = (2.0 * np.pi / n) * prod.astype(np.float64)
    cos = np.zeros((n_pad, n_pad), dtype=np.float32)
    sin = np.zeros((n_pad, n_pad), dtype=np.float32)
    cos[:n, :n] = np.cos(ang)
    sin[:n, :n] = np.sin(ang)
    return (jnp.asarray(cos, dtype=jnp.bfloat16),
            jnp.asarray(sin, dtype=jnp.bfloat16))


# ----------------------------- wrapper --------------------------------------

def fft_attention(x, mask=None):
    """real(FFT(FFT(x, dim=-1), dim=-2)).  `mask` accepted but unused (as in PyTorch)."""
    del mask
    B, S, D = x.shape

    # Padded sizes: lane-dense hidden dim, 8-aligned seq tiles.
    Dp = _round_up(D, 128)
    TS = min(256, _round_up(S, 8))          # seq tile (out rows & contraction)
    Sp = _round_up(S, TS)
    M = B * Sp                              # batch folded into matmul M dim
    TM = min(512, M)

    # DFT matrices (host-cached, zero-padded, bf16 for the MXU).
    cd, sd = _dft_cos_sin_padded(D, Dp)
    cs, ss = _dft_cos_sin_padded(S, Sp)

    # Pad + downcast the input once (bf16 feeds the MXU; accumulation is f32).
    xp = x
    if (Sp, Dp) != (S, D):
        xp = jnp.pad(xp, ((0, 0), (0, Sp - S), (0, Dp - D)))
    xp = xp.astype(jnp.bfloat16)
    x2 = xp.reshape(M, Dp)

    # ---------------- Stage 1:  A = X @ C_D,  B = X @ S_D -------------------
    s1_vmem = (2 * TM * Dp * 2              # x blocks (double-buffered, bf16)
               + 2 * Dp * Dp * 2            # cd, sd (single-buffered, bf16)
               + 2 * 2 * TM * Dp * 2)       # a, b outputs (double-buffered)
    s1_cost = pl.CostEstimate(
        flops=4 * M * Dp * Dp,
        transcendentals=0,
        bytes_accessed=M * Dp * 2 + 2 * Dp * Dp * 2 + 2 * M * Dp * 2)

    a2, b2 = pl.pallas_call(
        _stage1_kernel,
        out_shape=(jax.ShapeDtypeStruct((M, Dp), jnp.bfloat16),
                   jax.ShapeDtypeStruct((M, Dp), jnp.bfloat16)),
        grid_spec=pltpu.PrefetchScalarGridSpec(
            num_scalar_prefetch=0,
            grid=(pl.cdiv(M, TM),),
            in_specs=[
                pl.BlockSpec((TM, Dp), lambda m: (m, 0)),
                pl.BlockSpec((Dp, Dp), lambda m: (0, 0),
                             pipeline_mode=pl.Buffered(1)),
                pl.BlockSpec((Dp, Dp), lambda m: (0, 0),
                             pipeline_mode=pl.Buffered(1)),
            ],
            out_specs=[
                pl.BlockSpec((TM, Dp), lambda m: (m, 0)),
                pl.BlockSpec((TM, Dp), lambda m: (m, 0)),
            ],
        ),
        compiler_params=pltpu.CompilerParams(
            dimension_semantics=("parallel",),
            vmem_limit_bytes=min(128 << 20, s1_vmem + (8 << 20))),
        cost_estimate=s1_cost,
    )(x2, cd, sd)

    a3 = a2.reshape(B, Sp, Dp)
    b3 = b2.reshape(B, Sp, Dp)

    # ---------------- Stage 2:  out = C_S @ A - S_S @ B ---------------------
    n_s = Sp // TS
    s2_vmem = (2 * 2 * TS * TS * 2          # cs, ss blocks (double-buffered)
               + 2 * 2 * TS * Dp * 2        # a, b blocks
               + 2 * TS * Dp * 4)           # f32 output/accumulator block
    s2_cost = pl.CostEstimate(
        flops=4 * B * Sp * Sp * Dp,
        transcendentals=0,
        bytes_accessed=(2 * Sp * Sp * 2 + 2 * B * Sp * Dp * 2
                        + B * Sp * Dp * 4))

    out_p = pl.pallas_call(
        _stage2_kernel,
        out_shape=jax.ShapeDtypeStruct((B, Sp, Dp), jnp.float32),
        grid_spec=pltpu.PrefetchScalarGridSpec(
            num_scalar_prefetch=0,
            grid=(B, n_s, n_s),             # (batch, out-row tile, contraction)
            in_specs=[
                pl.BlockSpec((TS, TS), lambda b, i, k: (i, k)),
                pl.BlockSpec((TS, TS), lambda b, i, k: (i, k)),
                pl.BlockSpec((None, TS, Dp), lambda b, i, k: (b, k, 0)),
                pl.BlockSpec((None, TS, Dp), lambda b, i, k: (b, k, 0)),
            ],
            out_specs=pl.BlockSpec((None, TS, Dp), lambda b, i, k: (b, i, 0)),
        ),
        compiler_params=pltpu.CompilerParams(
            dimension_semantics=("parallel", "parallel", "arbitrary"),
            vmem_limit_bytes=min(128 << 20, s2_vmem + (8 << 20))),
        cost_estimate=s2_cost,
    )(cs, ss, a3, b3)

    out = out_p
    if (Sp, Dp) != (S, D):
        out = out[:, :S, :D]
    return out


# ----------------------------- test -----------------------------------------

if __name__ == "__main__":
    key = jax.random.PRNGKey(0)
    B, S, D = 2, 8, 32
    kx, _ = jax.random.split(key)
    x = jax.random.normal(kx, (B, S, D), dtype=jnp.float32)
    mask = jnp.ones((B, S), dtype=jnp.float32)      # unused, as in the PyTorch module

    out = jax.block_until_ready(fft_attention(x, mask))

    # 1) Tight check vs. the same algebra in plain JAX with identical
    #    bf16-input / f32-accumulation arithmetic (isolates kernel bugs).
    cd32, sd32 = _dft_cos_sin_padded(D, D)
    cs32, ss32 = _dft_cos_sin_padded(S, S)
    xb = x.astype(jnp.bfloat16)
    a_e = jnp.einsum("bsd,de->bse", xb, cd32,
                     preferred_element_type=jnp.float32).astype(jnp.bfloat16)
    b_e = jnp.einsum("bsd,de->bse", xb, sd32,
                     preferred_element_type=jnp.float32).astype(jnp.bfloat16)
    ref_bf16 = (jnp.einsum("ms,bsd->bmd", cs32, a_e,
                           preferred_element_type=jnp.float32)
                - jnp.einsum("ms,bsd->bmd", ss32, b_e,
                             preferred_element_type=jnp.float32))
    np.testing.assert_allclose(np.asarray(out), np.asarray(ref_bf16),
                               rtol=1e-2, atol=1e-2)

    # 2) Semantics check vs. the exact 2-D FFT reference; tolerance sized for
    #    bf16 MXU inputs (output std ~ sqrt(S*D) ~ 16 at these shapes).
    ref = jnp.real(jnp.fft.fft(jnp.fft.fft(x, axis=-1), axis=-2)).astype(jnp.float32)
    np.testing.assert_allclose(np.asarray(out), np.asarray(ref),
                               rtol=5e-2, atol=5e-1)

    print("KERNEL_OK")
</pallas_src>

<mosaic_0001>
module attributes {stable_mosaic.version = 11 : i64} {
  func.func @_stage1_kernel(%arg0: i32, %arg1: memref<16x128xbf16, #tpu.memory_space<vmem>>, %arg2: memref<128x128xbf16, #tpu.memory_space<vmem>>, %arg3: memref<128x128xbf16, #tpu.memory_space<vmem>>, %arg4: memref<16x128xbf16, #tpu.memory_space<vmem>>, %arg5: memref<16x128xbf16, #tpu.memory_space<vmem>>) attributes {dimension_semantics = [#tpu.dimension_semantics<parallel>], iteration_bounds = array<i64: 1>, scalar_prefetch = 0 : i64, scratch_operands = 0 : i64, tpu.core_type = #tpu.core_type<tc>, window_params = [{transform_indices = @transform_0, window_bounds = array<i64: 16, 128>}, {pipeline_mode = #tpu.pipeline_mode<synchronous>, transform_indices = @transform_1, window_bounds = array<i64: 128, 128>}, {pipeline_mode = #tpu.pipeline_mode<synchronous>, transform_indices = @transform_2, window_bounds = array<i64: 128, 128>}, {transform_indices = @transform_3, window_bounds = array<i64: 16, 128>}, {transform_indices = @transform_4, window_bounds = array<i64: 16, 128>}]} {
    %c0 = arith.constant 0 : index
    %c0_0 = arith.constant 0 : index
    %0 = vector.load %arg1[%c0, %c0_0] : memref<16x128xbf16, #tpu.memory_space<vmem>>, vector<16x128xbf16>
    %c0_1 = arith.constant 0 : index
    %c0_2 = arith.constant 0 : index
    %1 = vector.load %arg2[%c0_1, %c0_2] : memref<128x128xbf16, #tpu.memory_space<vmem>>, vector<128x128xbf16>
    %cst = arith.constant dense<0.000000e+00> : vector<16x128xf32>
    %2 = tpu.matmul %0, %1, %cst {dimension_numbers = #tpu.dot_dimension_numbers<[1], [0], [0], [1], [0, 0, 1, 1], [], []>} : vector<16x128xbf16>, vector<128x128xbf16>, vector<16x128xf32> -> vector<16x128xf32>
    %c0_3 = arith.constant 0 : index
    %c0_4 = arith.constant 0 : index
    %3 = vector.load %arg3[%c0_3, %c0_4] : memref<128x128xbf16, #tpu.memory_space<vmem>>, vector<128x128xbf16>
    %cst_5 = arith.constant dense<0.000000e+00> : vector<16x128xf32>
    %4 = tpu.matmul %0, %3, %cst_5 {dimension_numbers = #tpu.dot_dimension_numbers<[1], [0], [0], [1], [0, 0, 1, 1], [], []>} : vector<16x128xbf16>, vector<128x128xbf16>, vector<16x128xf32> -> vector<16x128xf32>
    %5 = arith.truncf %2 : vector<16x128xf32> to vector<16x128xbf16>
    %c0_6 = arith.constant 0 : index
    %c0_7 = arith.constant 0 : index
    %6 = vector.load %arg4[%c0_6, %c0_7] : memref<16x128xbf16, #tpu.memory_space<vmem>>, vector<16x128xbf16>
    tpu.vector_store %arg4[%c0_6, %c0_7], %5 {strides = array<i32>} : memref<16x128xbf16, #tpu.memory_space<vmem>>, vector<16x128xbf16>,
    %7 = arith.truncf %4 : vector<16x128xf32> to vector<16x128xbf16>
    %c0_8 = arith.constant 0 : index
    %c0_9 = arith.constant 0 : index
    %8 = vector.load %arg5[%c0_8, %c0_9] : memref<16x128xbf16, #tpu.memory_space<vmem>>, vector<16x128xbf16>
    tpu.vector_store %arg5[%c0_8, %c0_9], %7 {strides = array<i32>} : memref<16x128xbf16, #tpu.memory_space<vmem>>, vector<16x128xbf16>,
    return
  }
  func.func @transform_0(%arg0: i32) -> (i32, i32) {
    %c0_i32 = arith.constant 0 : i32
    %c0_i32_0 = arith.constant 0 : i32
    return %arg0, %c0_i32 : i32, i32
  }
  func.func @transform_1(%arg0: i32) -> (i32, i32) {
    %c0_i32 = arith.constant 0 : i32
    %c0_i32_0 = arith.constant 0 : i32
    %c0_i32_1 = arith.constant 0 : i32
    return %c0_i32, %c0_i32_0 : i32, i32
  }
  func.func @transform_2(%arg0: i32) -> (i32, i32) {
    %c0_i32 = arith.constant 0 : i32
    %c0_i32_0 = arith.constant 0 : i32
    %c0_i32_1 = arith.constant 0 : i32
    return %c0_i32, %c0_i32_0 : i32, i32
  }
  func.func @transform_3(%arg0: i32) -> (i32, i32) {
    %c0_i32 = arith.constant 0 : i32
    %c0_i32_0 = arith.constant 0 : i32
    return %arg0, %c0_i32 : i32, i32
  }
  func.func @transform_4(%arg0: i32) -> (i32, i32) {
    %c0_i32 = arith.constant 0 : i32
    %c0_i32_0 = arith.constant 0 : i32
    return %arg0, %c0_i32 : i32, i32
  }
}

</mosaic_0001>

<llo_original>
// kernel: tpu_custom_call.1
$region0: #{tpu_custom_call.1}
  #allocation0 [shape = 'u32[]', space=smem, size = 0x4, offset = 0x4, fixed_abs, tag = 'smem constant byte address 0x4 - core index']
  #allocation1 [shape = 'u32[144,128]{1,0:T(1,128)}', space=vmem, size = 0x12000, scoped, tag = 'internal scratch']
  %s0 = inlined_call_operand.hbm [shape: bf16[16,128], index: 0, kind: input, shape index: {}]
  %s1 = inlined_call_operand.hbm [shape: bf16[128,128], index: 1, kind: input, shape index: {}]
  %s2 = inlined_call_operand.hbm [shape: bf16[128,128], index: 2, kind: input, shape index: {}]
  %s3 = inlined_call_operand.hbm [shape: bf16[16,128], index: 3, kind: output, shape index: {0}]
  %s4 = inlined_call_operand.hbm [shape: bf16[16,128], index: 4, kind: output, shape index: {1}]
  %5 = xla_tuple %s3, %s4
  %s6 = sld [smem:[#allocation0]]
  $region42: #{tpu_custom_call.1} parent=0
    _
  %s8 = ssub.s32 1, %s6
  %s9 = scalar_select 0, %s8, %s6
  $region1: #{tpu_custom_call.1} parent=0
    #allocation2 [shape = 'u8[4096]{0}', space=vmem, size = 0x1000, scoped, tag = 'input window, operand 0, single buffered']
    #allocation3 [shape = 's32[1]{0}', space=sflag, size = 0x4, scoped, tag = 'scoped memory for tpu_custom_call.1']
    #allocation4 [shape = 's32[1]{0}', space=sflag, size = 0x4, scoped, tag = 'scoped memory for tpu_custom_call.1']
    #allocation5 [shape = 'u8[32768]{0}', space=vmem, size = 0x8000, scoped, tag = 'input window, operand 1, single buffered']
    #allocation6 [shape = 's32[1]{0}', space=sflag, size = 0x4, scoped, tag = 'scoped memory for tpu_custom_call.1']
    #allocation7 [shape = 'u8[32768]{0}', space=vmem, size = 0x8000, scoped, tag = 'input window, operand 2, single buffered']
    #allocation8 [shape = 'u8[4096]{0}', space=vmem, size = 0x1000, scoped, tag = 'output window, operand 0, single buffered']
    #allocation9 [shape = 'u8[4096]{0}', space=vmem, size = 0x1000, scoped, tag = 'output window, operand 1, single buffered']
    #allocation10 [shape = 's32[1]{0}', space=sflag, size = 0x4, scoped, tag = 'scoped memory for tpu_custom_call.1']
    %10 = vsyncpa [#allocation3], 0
    %11 = vsyncpa [#allocation6], 0
    %12 = vsyncpa [#allocation4], 0
    %13 = vsyncpa [#allocation10], 0
    // Predicated region
    $region2: #{tpu_custom_call.1} parent=1 // pred_check
      _
    $region3: #{tpu_custom_call.1} parent=1 // pred_check_branch
      %15 = sbr.rel (0) target = $region5
    $region4: #{tpu_custom_call.1} parent=1 // pred_region
      %s17 = ssub.s32 128, 128
      %18 = vsyncadd [#allocation3], %s17
      %s19 = sshll.u32 [#allocation2], 4
      %s20 = int_to_ptr.vmem [resolvable:$true] %s19
      %25 = dma.hbm_to_vmem [thread:$0]  %s0, 128, %s20, [#allocation3], 64, 64, 4
    $region5: #{tpu_custom_call.1} parent=1 // pred_fallthru
      _
    // Predicated region
    $region6: #{tpu_custom_call.1} parent=1 // pred_check
      _
    $region7: #{tpu_custom_call.1} parent=1 // pred_check_branch
      %27 = sbr.rel (0) target = $region9
    $region8: #{tpu_custom_call.1} parent=1 // pred_region
      %s29 = ssub.s32 1024, 1024
      %30 = vsyncadd [#allocation6], %s29
      %s31 = sshll.u32 [#allocation5], 4
      %s32 = int_to_ptr.vmem [resolvable:$true] %s31
      %37 = dma.hbm_to_vmem [thread:$0]  %s1, 1024, %s32, [#allocation6], 64, 64, 4
    $region9: #{tpu_custom_call.1} parent=1 // pred_fallthru
      _
    // Predicated region
    $region10: #{tpu_custom_call.1} parent=1 // pred_check
      _
    $region11: #{tpu_custom_call.1} parent=1 // pred_check_branch
      %39 = sbr.rel (0) target = $region13
    $region12: #{tpu_custom_call.1} parent=1 // pred_region
      %s41 = ssub.s32 1024, 1024
      %42 = vsyncadd [#allocation6], %s41
      %s43 = sshll.u32 [#allocation7], 4
      %s44 = int_to_ptr.vmem [resolvable:$true] %s43
      %49 = dma.hbm_to_vmem [thread:$0]  %s2, 1024, %s44, [#allocation6], 64, 64, 4
    $region13: #{tpu_custom_call.1} parent=1 // pred_fallthru
      _
    // Predicated region
    $region14: #{tpu_custom_call.1} parent=1 // pred_check
      _
    $region15: #{tpu_custom_call.1} parent=1 // pred_check_branch
      %51 = sbr.rel (0) target = $region17
    $region16: #{tpu_custom_call.1} parent=1 // pred_region
      %52 = dma.done [#allocation3], 128
    $region17: #{tpu_custom_call.1} parent=1 // pred_fallthru
      _
    // Predicated region
    $region18: #{tpu_custom_call.1} parent=1 // pred_check
      _
    $region19: #{tpu_custom_call.1} parent=1 // pred_check_branch
      %54 = sbr.rel (0) target = $region21
    $region20: #{tpu_custom_call.1} parent=1 // pred_region
      %55 = dma.done [#allocation6], 1024
    $region21: #{tpu_custom_call.1} parent=1 // pred_fallthru
      _
    // Predicated region
    $region22: #{tpu_custom_call.1} parent=1 // pred_check
      _
    $region23: #{tpu_custom_call.1} parent=1 // pred_check_branch
      %57 = sbr.rel (0) target = $region25
    $region24: #{tpu_custom_call.1} parent=1 // pred_region
      %58 = dma.done [#allocation6], 1024
    $region25: #{tpu_custom_call.1} parent=1 // pred_fallthru
      _
    %v60 = vld [vmem:[#allocation2] sm:$0xf]
    %v61 = vld [vmem:[#allocation2 + $0x4] sm:$0xf]
    %v62 = vld [vmem:[#allocation5] sm:$0xf]
    %v63 = vld [vmem:[#allocation5 + $0x4] sm:$0xf]
    %v64 = vld [vmem:[#allocation5 + $0x8] sm:$0xf]
    %v65 = vld [vmem:[#allocation5 + $0xc] sm:$0xf]
    %v66 = vld [vmem:[#allocation5 + $0x10] sm:$0xf]
    %v67 = vld [vmem:[#allocation5 + $0x14] sm:$0xf]
    %v68 = vld [vmem:[#allocation5 + $0x18] sm:$0xf]
    %v69 = vld [vmem:[#allocation5 + $0x1c] sm:$0xf]
    %v70 = vld [vmem:[#allocation5 + $0x20] sm:$0xf]
    %v71 = vld [vmem:[#allocation5 + $0x24] sm:$0xf]
    %v72 = vld [vmem:[#allocation5 + $0x28] sm:$0xf]
    %v73 = vld [vmem:[#allocation5 + $0x2c] sm:$0xf]
    %v74 = vld [vmem:[#allocation5 + $0x30] sm:$0xf]
    %v75 = vld [vmem:[#allocation5 + $0x34] sm:$0xf]
    %v76 = vld [vmem:[#allocation5 + $0x38] sm:$0xf]
    %v77 = vld [vmem:[#allocation5 + $0x3c] sm:$0xf]
    %v80 = vunpack.c.l.b16 %v60
    %v81 = vunpack.c.l.b16 %v61
    %v82 = vpack.c.b16 %v81, %v80
    %v100 = vunpack.c.l.b16 %v62
    %v101 = vunpack.c.l.b16 %v63
    %v102 = vunpack.c.l.b16 %v64
    %v103 = vunpack.c.l.b16 %v65
    %v104 = vunpack.c.l.b16 %v66
    %v105 = vunpack.c.l.b16 %v67
    %v106 = vunpack.c.l.b16 %v68
    %v107 = vunpack.c.l.b16 %v69
    %v108 = vunpack.c.l.b16 %v70
    %v109 = vunpack.c.l.b16 %v71
    %v110 = vunpack.c.l.b16 %v72
    %v111 = vunpack.c.l.b16 %v73
    %v112 = vunpack.c.l.b16 %v74
    %v113 = vunpack.c.l.b16 %v75
    %v114 = vunpack.c.l.b16 %v76
    %v115 = vunpack.c.l.b16 %v77
    %v116 = vpack.c.b16 %v101, %v100
    %v117 = vpack.c.b16 %v103, %v102
    %v118 = vpack.c.b16 %v105, %v104
    %v119 = vpack.c.b16 %v107, %v106
    %v120 = vpack.c.b16 %v109, %v108
    %v121 = vpack.c.b16 %v111, %v110
    %v122 = vpack.c.b16 %v113, %v112
    %v123 = vpack.c.b16 %v115, %v114
    %132 = vmatprep.subr.bf16.mxu0 0
    %133 = vmatpush1.bf16.msra.mxu0 %v116
    %134 = vmatprep.subr.bf16.mxu0 0
    %135 = vmatpush1.bf16.msra.mxu0 %v117
    %136 = vmatprep.subr.bf16.mxu0 0
    %137 = vmatpush1.bf16.msra.mxu0 %v118
    %138 = vmatprep.subr.bf16.mxu0 0
    %139 = vmatpush1.bf16.msra.mxu0 %v119
    %140 = vmatprep.subr.bf16.mxu0 0
    %141 = vmatpush1.bf16.msra.mxu0 %v120
    %142 = vmatprep.subr.bf16.mxu0 0
    %143 = vmatpush1.bf16.msra.mxu0 %v121
    %144 = vmatprep.subr.bf16.mxu0 0
    %145 = vmatpush1.bf16.msra.mxu0 %v122
    %146 = vmatprep.subr.bf16.mxu0 0
    %147 = vmatpush1.bf16.msra.mxu0 %v123
    %148 = vmatprep.subr.bf16.mxu0 0
    %149 = vmatpush1.bf16.msra.mxu0 0
    %150 = vmatprep.subr.bf16.mxu0 0
    %151 = vmatpush1.bf16.msra.mxu0 0
    %152 = vmatprep.subr.bf16.mxu0 0
    %153 = vmatpush1.bf16.msra.mxu0 0
    %154 = vmatprep.subr.bf16.mxu0 0
    %155 = vmatpush1.bf16.msra.mxu0 0
    %156 = vmatprep.subr.bf16.mxu0 0
    %157 = vmatpush1.bf16.msra.mxu0 0
    %158 = vmatprep.subr.bf16.mxu0 0
    %159 = vmatpush1.bf16.msra.mxu0 0
    %160 = vmatprep.subr.bf16.mxu0 0
    %161 = vmatpush1.bf16.msra.mxu0 0
    %162 = vmatprep.subr.bf16.mxu0 0
    %163 = vmatpush1.bf16.msra.mxu0 0
    %164 = vmatprep.mubr.bf16.mxu0 0
    %165 = vmatmul.mubr.bf16.gmra.mrb[0].mxu0 %v82
    %v166 = vpop.f32.mrb[0].mxu0
    %v167 = vadd.f32 0.0, %v166
    %v168 = vpop.f32.mrb[0].mxu0
    %v169 = vpop.f32.mrb[0].mxu0
    %v170 = vadd.f32 0.0, %v169
    %v171 = vpop.f32.mrb[0].mxu0
    %172 = vdwg.mxu0
    %v173 = vld [vmem:[#allocation7] sm:$0xf]
    %v174 = vld [vmem:[#allocation7 + $0x4] sm:$0xf]
    %v175 = vld [vmem:[#allocation7 + $0x8] sm:$0xf]
    %v176 = vld [vmem:[#allocation7 + $0xc] sm:$0xf]
    %v177 = vld [vmem:[#allocation7 + $0x10] sm:$0xf]
    %v178 = vld [vmem:[#allocation7 + $0x14] sm:$0xf]
    %v179 = vld [vmem:[#allocation7 + $0x18] sm:$0xf]
    %v180 = vld [vmem:[#allocation7 + $0x1c] sm:$0xf]
    %v181 = vld [vmem:[#allocation7 + $0x20] sm:$0xf]
    %v182 = vld [vmem:[#allocation7 + $0x24] sm:$0xf]
    %v183 = vld [vmem:[#allocation7 + $0x28] sm:$0xf]
    %v184 = vld [vmem:[#allocation7 + $0x2c] sm:$0xf]
    %v185 = vld [vmem:[#allocation7 + $0x30] sm:$0xf]
    %v186 = vld [vmem:[#allocation7 + $0x34] sm:$0xf]
    %v187 = vld [vmem:[#allocation7 + $0x38] sm:$0xf]
    %v188 = vld [vmem:[#allocation7 + $0x3c] sm:$0xf]
    %v205 = vunpack.c.l.b16 %v173
    %v206 = vunpack.c.l.b16 %v174
    %v207 = vunpack.c.l.b16 %v175
    %v208 = vunpack.c.l.b16 %v176
    %v209 = vunpack.c.l.b16 %v177
    %v210 = vunpack.c.l.b16 %v178
    %v211 = vunpack.c.l.b16 %v179
    %v212 = vunpack.c.l.b16 %v180
    %v213 = vunpack.c.l.b16 %v181
    %v214 = vunpack.c.l.b16 %v182
    %v215 = vunpack.c.l.b16 %v183
    %v216 = vunpack.c.l.b16 %v184
    %v217 = vunpack.c.l.b16 %v185
    %v218 = vunpack.c.l.b16 %v186
    %v219 = vunpack.c.l.b16 %v187
    %v220 = vunpack.c.l.b16 %v188
    %v221 = vpack.c.b16 %v206, %v205
    %v222 = vpack.c.b16 %v208, %v207
    %v223 = vpack.c.b16 %v210, %v209
    %v224 = vpack.c.b16 %v212, %v211
    %v225 = vpack.c.b16 %v214, %v213
    %v226 = vpack.c.b16 %v216, %v215
    %v227 = vpack.c.b16 %v218, %v217
    %v228 = vpack.c.b16 %v220, %v219
    %237 = vmatprep.subr.bf16.mxu0 0
    %238 = vmatpush1.bf16.msra.mxu0 %v221
    %239 = vmatprep.subr.bf16.mxu0 0
    %240 = vmatpush1.bf16.msra.mxu0 %v222
    %241 = vmatprep.subr.bf16.mxu0 0
    %242 = vmatpush1.bf16.msra.mxu0 %v223
    %243 = vmatprep.subr.bf16.mxu0 0
    %244 = vmatpush1.bf16.msra.mxu0 %v224
    %245 = vmatprep.subr.bf16.mxu0 0
    %246 = vmatpush1.bf16.msra.mxu0 %v225
    %247 = vmatprep.subr.bf16.mxu0 0
    %248 = vmatpush1.bf16.msra.mxu0 %v226
    %249 = vmatprep.subr.bf16.mxu0 0
    %250 = vmatpush1.bf16.msra.mxu0 %v227
    %251 = vmatprep.subr.bf16.mxu0 0
    %252 = vmatpush1.bf16.msra.mxu0 %v228
    %253 = vmatprep.subr.bf16.mxu0 0
    %254 = vmatpush1.bf16.msra.mxu0 0
    %255 = vmatprep.subr.bf16.mxu0 0
    %256 = vmatpush1.bf16.msra.mxu0 0
    %257 = vmatprep.subr.bf16.mxu0 0
    %258 = vmatpush1.bf16.msra.mxu0 0
    %259 = vmatprep.subr.bf16.mxu0 0
    %260 = vmatpush1.bf16.msra.mxu0 0
    %261 = vmatprep.subr.bf16.mxu0 0
    %262 = vmatpush1.bf16.msra.mxu0 0
    %263 = vmatprep.subr.bf16.mxu0 0
    %264 = vmatpush1.bf16.msra.mxu0 0
    %265 = vmatprep.subr.bf16.mxu0 0
    %266 = vmatpush1.bf16.msra.mxu0 0
    %267 = vmatprep.subr.bf16.mxu0 0
    %268 = vmatpush1.bf16.msra.mxu0 0
    %269 = vmatprep.mubr.bf16.mxu0 0
    %270 = vmatmul.mubr.bf16.gmra.mrb[0].mxu0 %v82
    %v271 = vpop.f32.mrb[0].mxu0
    %v272 = vadd.f32 0.0, %v271
    %v273 = vpop.f32.mrb[0].mxu0
    %v274 = vpop.f32.mrb[0].mxu0
    %v275 = vadd.f32 0.0, %v274
    %v276 = vpop.f32.mrb[0].mxu0
    %277 = vdwg.mxu0
    %v278 = vpack.c.bf16 %v170, %v167
    %v280 = vunpack.c.l.b16 %v278
    %v281 = vunpack.c.h.b16 %v278
    %v282 = vpack.c.b16 %v280, %v280
    %v283 = vpack.c.b16 %v281, %v281
    %286 = vst [vmem:[#allocation8] sm:$0xf] %v282
    %287 = vst [vmem:[#allocation8 + $0x4] sm:$0xf] %v283
    %v288 = vpack.c.bf16 %v275, %v272
    %v290 = vunpack.c.l.b16 %v288
    %v291 = vunpack.c.h.b16 %v288
    %v292 = vpack.c.b16 %v290, %v290
    %v293 = vpack.c.b16 %v291, %v291
    %296 = vst [vmem:[#allocation9] sm:$0xf] %v292
    %297 = vst [vmem:[#allocation9 + $0x4] sm:$0xf] %v293
    // Predicated region
    $region26: #{tpu_custom_call.1} parent=1 // pred_check
      _
    $region27: #{tpu_custom_call.1} parent=1 // pred_check_branch
      %299 = sbr.rel (0) target = $region29
    $region28: #{tpu_custom_call.1} parent=1 // pred_region
      %s301 = ssub.s32 128, 128
      %302 = vsyncadd [#allocation4], %s301
      %s303 = sshll.u32 [#allocation8], 4
      %s304 = int_to_ptr.vmem [resolvable:$true] %s303
      %309 = dma.vmem_to_hbm [thread:$0]  %s304, 128, %s3, [#allocation4], 64, 64, 4
    $region29: #{tpu_custom_call.1} parent=1 // pred_fallthru
      _
    // Predicated region
    $region30: #{tpu_custom_call.1} parent=1 // pred_check
      _
    $region31: #{tpu_custom_call.1} parent=1 // pred_check_branch
      %311 = sbr.rel (0) target = $region33
    $region32: #{tpu_custom_call.1} parent=1 // pred_region
      %s313 = ssub.s32 128, 128
      %314 = vsyncadd [#allocation10], %s313
      %s315 = sshll.u32 [#allocation9], 4
      %s316 = int_to_ptr.vmem [resolvable:$true] %s315
      %321 = dma.vmem_to_hbm [thread:$0]  %s316, 128, %s4, [#allocation10], 64, 64, 4
    $region33: #{tpu_custom_call.1} parent=1 // pred_fallthru
      _
    // Predicated region
    $region34: #{tpu_custom_call.1} parent=1 // pred_check
      _
    $region35: #{tpu_custom_call.1} parent=1 // pred_check_branch
      %323 = sbr.rel (0) target = $region37
    $region36: #{tpu_custom_call.1} parent=1 // pred_region
      %324 = dma.done [#allocation4], 128
    $region37: #{tpu_custom_call.1} parent=1 // pred_fallthru
      _
    // Predicated region
    $region38: #{tpu_custom_call.1} parent=1 // pred_check
      _
    $region39: #{tpu_custom_call.1} parent=1 // pred_check_branch
      %326 = sbr.rel (0) target = $region41
    $region40: #{tpu_custom_call.1} parent=1 // pred_region
      %327 = dma.done [#allocation10], 128
    $region41: #{tpu_custom_call.1} parent=1 // pred_fallthru
      _
    %328 = vsyncpa [#allocation3], 1
    %329 = vsyncpa [#allocation6], 1
    %330 = vsyncpa [#allocation4], 1
    %331 = vsyncpa [#allocation10], 1

</llo_original>
